<compile_context>
chip_gen: v5e
topology: v5e:2x2
jax: 0.10.0
libtpu: 0.0.40
codegen_flags: <defaults>
</compile_context>

<pallas_src>
import jax
import jax.numpy as jnp
from jax.experimental import pallas as pl
from jax.experimental.pallas import tpu as pltpu


def mlp_kernel(x_ref, w1_ref, b1_ref, w2_ref, b2_ref, w3_ref, b3_ref, o_ref):
    # x arrives in its HBM storage dtype; cast to bf16 in VMEM (no wrapper astype pass).
    x = x_ref[...].astype(jnp.bfloat16)

    # Layer 1: (TB, 768)bf16 @ (768, 256)bf16 -> f32 acc, bias + ReLU in f32.
    h1 = jnp.dot(x, w1_ref[...], preferred_element_type=jnp.float32)
    h1 = jnp.maximum(h1 + b1_ref[...], 0.0).astype(jnp.bfloat16)

    # Dropout(0.4): identity in inference mode.
    # TODO(synk): training-mode dropout would use pltpu.prng_seed + prng_random_bits
    #             (mask + 1/(1-p) scaling).

    # Layer 2: (TB, 256)bf16 @ (256, 64)bf16 -> f32 acc, bias + ReLU in f32.
    h2 = jnp.dot(h1, w2_ref[...], preferred_element_type=jnp.float32)
    h2 = jnp.maximum(h2 + b2_ref[...], 0.0)

    # Layer 3 (64 -> 1): keep it off the MXU (VPU multiply + lane reduction) and emit
    # the per-tile result as one lane-dense (1, TB) row so the output store is an
    # unmasked, lane-major vst instead of a (TB, 1) masked column.
    out = jnp.sum(h2 * w3_ref[...], axis=-1) + b3_ref[0]   # (TB,)
    o_ref[...] = out.reshape(1, -1).astype(o_ref.dtype)    # (1, TB)


def _round_up(n, m):
    return ((n + m - 1) // m) * m


def _pick_tb(batch):
    """Batch-tile rows: multiple of 8, capped at 1024, >= 2 grid steps when possible."""
    if batch <= 16:
        return max(8, _round_up(batch, 8))
    # >= 2 grid steps so v7x's two TensorCores both get work; cap at 1024 rows
    # (f32 x stream double-buffered at TB=1024 is ~6 MiB; total footprint ~10 MiB,
    # comfortably inside every generation's VMEM budget).
    return min(1024, _round_up(pl.cdiv(batch, 2), 8))


def text_classifier_forward(x, params, tb=None):
    """Forward pass of the TextClassifier MLP.

    x: (B, 768) float32 (or bfloat16) activations. Never copied / padded / cast in the
       wrapper -- the kernel streams x in its storage dtype and casts to bf16 in VMEM.
    params: f32 params from init_params (weights pre-transposed to (in, out)).
    Returns (B, 1) float32 logits.
    """
    w1, b1, w2, b2, w3, b3 = params
    B, D = x.shape

    TB = _pick_tb(B) if tb is None else tb
    # Last tile may run past B; Pallas clips the edge block (garbage tail rows only
    # reach output rows that are sliced off below), so no jnp.pad copy of x is needed.
    grid_b = pl.cdiv(B, TB)

    # Weights are tiny (~0.4 MiB total); one-off bf16 cast, then VMEM-resident.
    w1b = w1.astype(jnp.bfloat16)
    w2b = w2.astype(jnp.bfloat16)
    b1f = b1.astype(jnp.float32)
    b2f = b2.astype(jnp.float32)
    w3_row = w3.reshape(1, -1).astype(jnp.float32)   # (1, 64)
    b3_s = b3.reshape((1,)).astype(jnp.float32)      # scalar, lives in SMEM

    out = pl.pallas_call(
        mlp_kernel,
        # Lane-dense output: one (1, TB) row per batch tile; reshaped to (B, 1) below.
        out_shape=jax.ShapeDtypeStruct((grid_b, TB), jnp.float32),
        grid=(grid_b,),
        in_specs=[
            # x: streamed per batch tile (double-buffered by the Pallas pipeline).
            pl.BlockSpec((TB, D), lambda i: (i, 0)),
            # Weights/biases: constant index_map -> fetched once, stay VMEM-resident.
            # (pl.Buffered(1) would shave ~0.5 MiB of double-buffering here, but the
            # footprint already has ample headroom, so keep default pipelining.)
            pl.BlockSpec(w1b.shape, lambda i: (0, 0)),
            pl.BlockSpec(b1f.shape, lambda i: (0, 0)),
            pl.BlockSpec(w2b.shape, lambda i: (0, 0)),
            pl.BlockSpec(b2f.shape, lambda i: (0, 0)),
            pl.BlockSpec(w3_row.shape, lambda i: (0, 0)),
            # b3: scalar via SMEM (avoids an (8,128)-padded VMEM tile / DMA for it).
            pl.BlockSpec(memory_space=pltpu.MemorySpace.SMEM),
        ],
        out_specs=pl.BlockSpec((1, TB), lambda i: (i, 0)),
        compiler_params=pltpu.CompilerParams(
            # Independent batch tiles -> shard across v7x's two TensorCores.
            dimension_semantics=("parallel",),
            # ~10 MiB used at TB=1024; explicit limit keeps v5e (16 MiB scoped default)
            # safe if callers bump `tb` up to ~2048.
            vmem_limit_bytes=32 * 1024 * 1024,
        ),
    )(x, w1b, b1f, w2b, b2f, w3_row, b3_s)

    return out.reshape(grid_b * TB, 1)[:B]


def init_params(key, input_dim=768):
    k1, k2, k3, k4, k5, k6 = jax.random.split(key, 6)

    # Deterministic, PyTorch-Linear-like uniform init (U[-1/sqrt(fan_in), 1/sqrt(fan_in)]).
    def lin(kw, kb, fan_in, fan_out):
        bound = 1.0 / jnp.sqrt(fan_in)
        w = jax.random.uniform(kw, (fan_in, fan_out), jnp.float32, -bound, bound)
        b = jax.random.uniform(kb, (1, fan_out), jnp.float32, -bound, bound)
        return w, b

    w1, b1 = lin(k1, k2, input_dim, 256)
    w2, b2 = lin(k3, k4, 256, 64)
    w3, b3 = lin(k5, k6, 64, 1)
    return (w1, b1, w2, b2, w3, b3)


def reference_forward(x, params):
    """Pure-JAX reference mirroring the kernel's bf16-storage / f32-accumulation numerics."""
    w1, b1, w2, b2, w3, b3 = params
    xb = x.astype(jnp.bfloat16)
    w1b = w1.astype(jnp.bfloat16)
    w2b = w2.astype(jnp.bfloat16)
    h1 = jnp.dot(xb, w1b, preferred_element_type=jnp.float32)
    h1 = jnp.maximum(h1 + b1, 0.0).astype(jnp.bfloat16)
    h2 = jnp.dot(h1, w2b, preferred_element_type=jnp.float32)
    h2 = jnp.maximum(h2 + b2, 0.0)
    return jnp.sum(h2 * w3.reshape(1, -1), axis=-1, keepdims=True) + b3.reshape(1, 1)


if __name__ == "__main__":
    key = jax.random.PRNGKey(0)
    kx, kp = jax.random.split(key)

    D = 768  # input_dim fixed at 768 by the module.
    params = init_params(kp, input_dim=D)

    # Small single-tile smoke test plus a multi-tile batch that exercises the batch
    # grid, the "parallel" dimension, and the lane-dense (1, TB) output path.
    for B in (8, 256):
        x = jax.random.normal(jax.random.fold_in(kx, B), (B, D), jnp.float32)
        out = jax.block_until_ready(text_classifier_forward(x, params))
        ref = reference_forward(x, params)
        assert out.shape == (B, 1), out.shape
        assert jnp.allclose(out, ref, atol=2e-3, rtol=2e-3), f"mismatch vs reference at B={B}"

    print("KERNEL_OK")
</pallas_src>

<mosaic_0001>
module attributes {stable_mosaic.version = 11 : i64} {
  func.func @mlp_kernel(%arg0: i32, %arg1: memref<8x768xf32, #tpu.memory_space<vmem>>, %arg2: memref<768x256xbf16, #tpu.memory_space<vmem>>, %arg3: memref<1x256xf32, #tpu.memory_space<vmem>>, %arg4: memref<256x64xbf16, #tpu.memory_space<vmem>>, %arg5: memref<1x64xf32, #tpu.memory_space<vmem>>, %arg6: memref<1x64xf32, #tpu.memory_space<vmem>>, %arg7: memref<1xf32, #tpu.memory_space<smem>>, %arg8: memref<1x8xf32, #tpu.memory_space<vmem>>) attributes {dimension_semantics = [#tpu.dimension_semantics<parallel>], iteration_bounds = array<i64: 1>, scalar_prefetch = 0 : i64, scratch_operands = 0 : i64, tpu.core_type = #tpu.core_type<tc>, window_params = [{transform_indices = @transform_0, window_bounds = array<i64: 8, 768>}, {pipeline_mode = #tpu.pipeline_mode<synchronous>, transform_indices = @transform_1, window_bounds = array<i64: 768, 256>}, {pipeline_mode = #tpu.pipeline_mode<synchronous>, transform_indices = @transform_2, window_bounds = array<i64: 1, 256>}, {pipeline_mode = #tpu.pipeline_mode<synchronous>, transform_indices = @transform_3, window_bounds = array<i64: 256, 64>}, {pipeline_mode = #tpu.pipeline_mode<synchronous>, transform_indices = @transform_4, window_bounds = array<i64: 1, 64>}, {pipeline_mode = #tpu.pipeline_mode<synchronous>, transform_indices = @transform_5, window_bounds = array<i64: 1, 64>}, {transform_indices = @transform_6, window_bounds = array<i64: 1>}, {transform_indices = @transform_7, window_bounds = array<i64: 1, 8>}]} {
    %c0 = arith.constant 0 : index
    %c0_0 = arith.constant 0 : index
    %0 = vector.load %arg1[%c0, %c0_0] : memref<8x768xf32, #tpu.memory_space<vmem>>, vector<8x768xf32>
    %1 = arith.truncf %0 : vector<8x768xf32> to vector<8x768xbf16>
    %c0_1 = arith.constant 0 : index
    %c0_2 = arith.constant 0 : index
    %2 = vector.load %arg2[%c0_1, %c0_2] : memref<768x256xbf16, #tpu.memory_space<vmem>>, vector<768x256xbf16>
    %cst = arith.constant dense<0.000000e+00> : vector<8x256xf32>
    %3 = tpu.matmul %1, %2, %cst {dimension_numbers = #tpu.dot_dimension_numbers<[1], [0], [0], [1], [0, 0, 1, 1], [], []>} : vector<8x768xbf16>, vector<768x256xbf16>, vector<8x256xf32> -> vector<8x256xf32>
    %c0_3 = arith.constant 0 : index
    %c0_4 = arith.constant 0 : index
    %4 = vector.load %arg3[%c0_3, %c0_4] : memref<1x256xf32, #tpu.memory_space<vmem>>, vector<1x256xf32>
    %5 = vector.broadcast %4 : vector<1x256xf32> to vector<8x256xf32>
    %6 = arith.addf %3, %5 : vector<8x256xf32>
    %cst_5 = arith.constant 0.000000e+00 : f32
    %7 = vector.broadcast %cst_5 : f32 to vector<8x256xf32>
    %8 = arith.maximumf %6, %7 : vector<8x256xf32>
    %9 = arith.truncf %8 : vector<8x256xf32> to vector<8x256xbf16>
    %c0_6 = arith.constant 0 : index
    %c0_7 = arith.constant 0 : index
    %10 = vector.load %arg4[%c0_6, %c0_7] : memref<256x64xbf16, #tpu.memory_space<vmem>>, vector<256x64xbf16>
    %cst_8 = arith.constant dense<0.000000e+00> : vector<8x64xf32>
    %11 = tpu.matmul %9, %10, %cst_8 {dimension_numbers = #tpu.dot_dimension_numbers<[1], [0], [0], [1], [0, 0, 1, 1], [], []>} : vector<8x256xbf16>, vector<256x64xbf16>, vector<8x64xf32> -> vector<8x64xf32>
    %c0_9 = arith.constant 0 : index
    %c0_10 = arith.constant 0 : index
    %12 = vector.load %arg5[%c0_9, %c0_10] : memref<1x64xf32, #tpu.memory_space<vmem>>, vector<1x64xf32>
    %13 = vector.broadcast %12 : vector<1x64xf32> to vector<8x64xf32>
    %14 = arith.addf %11, %13 : vector<8x64xf32>
    %cst_11 = arith.constant 0.000000e+00 : f32
    %15 = vector.broadcast %cst_11 : f32 to vector<8x64xf32>
    %16 = arith.maximumf %14, %15 : vector<8x64xf32>
    %c0_12 = arith.constant 0 : index
    %c0_13 = arith.constant 0 : index
    %17 = vector.load %arg6[%c0_12, %c0_13] : memref<1x64xf32, #tpu.memory_space<vmem>>, vector<1x64xf32>
    %18 = vector.broadcast %17 : vector<1x64xf32> to vector<8x64xf32>
    %19 = arith.mulf %16, %18 : vector<8x64xf32>
    %cst_14 = arith.constant dense<0.000000e+00> : vector<8xf32>
    %20 = vector.multi_reduction <add>, %19, %cst_14 [1] : vector<8x64xf32> to vector<8xf32>
    %c0_15 = arith.constant 0 : index
    %21 = memref.load %arg7[%c0_15] : memref<1xf32, #tpu.memory_space<smem>>
    %22 = vector.broadcast %21 : f32 to vector<8xf32>
    %23 = arith.addf %20, %22 : vector<8xf32>
    %24 = vector.shape_cast %23 : vector<8xf32> to vector<1x8xf32>
    %c0_16 = arith.constant 0 : index
    %c0_17 = arith.constant 0 : index
    %25 = vector.load %arg8[%c0_16, %c0_17] : memref<1x8xf32, #tpu.memory_space<vmem>>, vector<1x8xf32>
    tpu.vector_store %arg8[%c0_16, %c0_17], %24 {strides = array<i32>} : memref<1x8xf32, #tpu.memory_space<vmem>>, vector<1x8xf32>,
    return
  }
  func.func @transform_0(%arg0: i32) -> (i32, i32) {
    %c0_i32 = arith.constant 0 : i32
    %c0_i32_0 = arith.constant 0 : i32
    return %arg0, %c0_i32 : i32, i32
  }
  func.func @transform_1(%arg0: i32) -> (i32, i32) {
    %c0_i32 = arith.constant 0 : i32
    %c0_i32_0 = arith.constant 0 : i32
    %c0_i32_1 = arith.constant 0 : i32
    return %c0_i32, %c0_i32_0 : i32, i32
  }
  func.func @transform_2(%arg0: i32) -> (i32, i32) {
    %c0_i32 = arith.constant 0 : i32
    %c0_i32_0 = arith.constant 0 : i32
    %c0_i32_1 = arith.constant 0 : i32
    return %c0_i32, %c0_i32_0 : i32, i32
  }
  func.func @transform_3(%arg0: i32) -> (i32, i32) {
    %c0_i32 = arith.constant 0 : i32
    %c0_i32_0 = arith.constant 0 : i32
    %c0_i32_1 = arith.constant 0 : i32
    return %c0_i32, %c0_i32_0 : i32, i32
  }
  func.func @transform_4(%arg0: i32) -> (i32, i32) {
    %c0_i32 = arith.constant 0 : i32
    %c0_i32_0 = arith.constant 0 : i32
    %c0_i32_1 = arith.constant 0 : i32
    return %c0_i32, %c0_i32_0 : i32, i32
  }
  func.func @transform_5(%arg0: i32) -> (i32, i32) {
    %c0_i32 = arith.constant 0 : i32
    %c0_i32_0 = arith.constant 0 : i32
    %c0_i32_1 = arith.constant 0 : i32
    return %c0_i32, %c0_i32_0 : i32, i32
  }
  func.func @transform_6(%arg0: i32) -> i32 {
    %c0_i32 = arith.constant 0 : i32
    %c0_i32_0 = arith.constant 0 : i32
    return %c0_i32 : i32
  }
  func.func @transform_7(%arg0: i32) -> (i32, i32) {
    %c0_i32 = arith.constant 0 : i32
    %c0_i32_0 = arith.constant 0 : i32
    return %arg0, %c0_i32 : i32, i32
  }
}

</mosaic_0001>

<llo_original>
// kernel: tpu_custom_call.1
$region0: #{tpu_custom_call.1}
  #allocation0 [shape = 'u32[]', space=smem, size = 0x4, offset = 0x4, fixed_abs, tag = 'smem constant byte address 0x4 - core index']
  #allocation1 [shape = 'u32[72,128]{1,0:T(1,128)}', space=vmem, size = 0x9000, scoped, tag = 'internal scratch']
  #allocation2 [shape = 'f32[1]{0:T(128)S(6)}', space=smem, size = 0x200, scoped, tag = 'scoped memory for tpu_custom_call.1']
  %s0 = inlined_call_operand.vmem [shape: f32[8,768], index: 0, kind: input, shape index: {}]
  %s1 = inlined_call_operand.hbm [shape: bf16[768,256], index: 1, kind: input, shape index: {}]
  %s2 = inlined_call_operand.vmem [shape: f32[1,256], index: 2, kind: input, shape index: {}]
  %s3 = inlined_call_operand.vmem [shape: bf16[256,64], index: 3, kind: input, shape index: {}]
  %s4 = inlined_call_operand.vmem [shape: f32[1,64], index: 4, kind: input, shape index: {}]
  %s5 = inlined_call_operand.vmem [shape: f32[1,64], index: 5, kind: input, shape index: {}]
  %s6 = inlined_call_operand.<no memory space> [shape: f32[1], index: 6, kind: input, shape index: {}]
  %s7 = inlined_call_operand.hbm [shape: f32[1,8], index: 7, kind: output, shape index: {}]
  %s8 = sld [smem:[#allocation0]]
  $region42: #{tpu_custom_call.1} parent=0
    _
  %s10 = ssub.s32 1, %s8
  %s11 = scalar_select 0, %s10, %s8
  %12 = sst [smem:[#allocation2]] %s6
  $region1: #{tpu_custom_call.1} parent=0
    #allocation3 [shape = 'u8[393216]{0}', space=vmem, size = 0x60000, scoped, tag = 'input window, operand 1, single buffered']
    #allocation4 [shape = 's32[1]{0}', space=sflag, size = 0x4, scoped, tag = 'scoped memory for tpu_custom_call.1']
    #allocation5 [shape = 's32[1]{0}', space=sflag, size = 0x4, scoped, tag = 'scoped memory for tpu_custom_call.1']
    #allocation6 [shape = 'u8[512]{0}', space=vmem, size = 0x400, scoped, tag = 'output window, operand 0, single buffered']
    %13 = vsyncpa [#allocation4], 0
    %14 = vsyncpa [#allocation5], 0
    // Predicated region
    $region2: #{tpu_custom_call.1} parent=1 // pred_check
      _
    $region3: #{tpu_custom_call.1} parent=1 // pred_check_branch
      %16 = sbr.rel (0) target = $region5
    $region4: #{tpu_custom_call.1} parent=1 // pred_region
      _
    $region5: #{tpu_custom_call.1} parent=1 // pred_fallthru
      _
    // Predicated region
    $region6: #{tpu_custom_call.1} parent=1 // pred_check
      _
    $region7: #{tpu_custom_call.1} parent=1 // pred_check_branch
      %18 = sbr.rel (0) target = $region9
    $region8: #{tpu_custom_call.1} parent=1 // pred_region
      %20 = vsyncadd [#allocation4], 0
      %s21 = sshll.u32 %s1, 4
      %s22 = int_to_ptr.hbm [resolvable:$true] %s21
      %s23 = sshll.u32 [#allocation3], 4
      %s24 = int_to_ptr.vmem [resolvable:$true] %s23
      %29 = dma.hbm_to_vmem [thread:$0]  %s22, 12288, %s24, [#allocation4], 128, 128, 8
    $region9: #{tpu_custom_call.1} parent=1 // pred_fallthru
      _
    // Predicated region
    $region10: #{tpu_custom_call.1} parent=1 // pred_check
      _
    $region11: #{tpu_custom_call.1} parent=1 // pred_check_branch
      %31 = sbr.rel (0) target = $region13
    $region12: #{tpu_custom_call.1} parent=1 // pred_region
      _
    $region13: #{tpu_custom_call.1} parent=1 // pred_fallthru
      _
    // Predicated region
    $region14: #{tpu_custom_call.1} parent=1 // pred_check
      _
    $region15: #{tpu_custom_call.1} parent=1 // pred_check_branch
      %33 = sbr.rel (0) target = $region17
    $region16: #{tpu_custom_call.1} parent=1 // pred_region
      _
    $region17: #{tpu_custom_call.1} parent=1 // pred_fallthru
      _
    // Predicated region
    $region18: #{tpu_custom_call.1} parent=1 // pred_check
      _
    $region19: #{tpu_custom_call.1} parent=1 // pred_check_branch
      %35 = sbr.rel (0) target = $region21
    $region20: #{tpu_custom_call.1} parent=1 // pred_region
      _
    $region21: #{tpu_custom_call.1} parent=1 // pred_fallthru
      _
    // Predicated region
    $region22: #{tpu_custom_call.1} parent=1 // pred_check
      _
    $region23: #{tpu_custom_call.1} parent=1 // pred_check_branch
      %37 = sbr.rel (0) target = $region25
    $region24: #{tpu_custom_call.1} parent=1 // pred_region
      _
    $region25: #{tpu_custom_call.1} parent=1 // pred_fallthru
      _
    // Predicated region
    $region26: #{tpu_custom_call.1} parent=1 // pred_check
      _
    $region27: #{tpu_custom_call.1} parent=1 // pred_check_branch
      %39 = sbr.rel (0) target = $region29
    $region28: #{tpu_custom_call.1} parent=1 // pred_region
      _
    $region29: #{tpu_custom_call.1} parent=1 // pred_fallthru
      _
    // Predicated region
    $region30: #{tpu_custom_call.1} parent=1 // pred_check
      _
    $region31: #{tpu_custom_call.1} parent=1 // pred_check_branch
      %41 = sbr.rel (0) target = $region33
    $region32: #{tpu_custom_call.1} parent=1 // pred_region
      %43 = dma.done [#allocation4], 12288
    $region33: #{tpu_custom_call.1} parent=1 // pred_fallthru
      _
    %v44 = vld [vmem:[%s0] sm:$0xff]
    %v45 = vld [vmem:[%s0 + $0x8] sm:$0xff]
    %v46 = vld [vmem:[%s0 + $0x10] sm:$0xff]
    %v47 = vld [vmem:[%s0 + $0x18] sm:$0xff]
    %v48 = vld [vmem:[%s0 + $0x20] sm:$0xff]
    %v49 = vld [vmem:[%s0 + $0x28] sm:$0xff]
    %v50 = vpack.c.bf16 %v44, %v44
    %v51 = vpack.c.bf16 %v45, %v45
    %v52 = vpack.c.bf16 %v46, %v46
    %v53 = vpack.c.bf16 %v47, %v47
    %v54 = vpack.c.bf16 %v48, %v48
    %v55 = vpack.c.bf16 %v49, %v49
    %v56 = vld [vmem:[#allocation3] sm:$0xff]
    %v57 = vld [vmem:[#allocation3 + $0x8] sm:$0xff]
    %v58 = vld [vmem:[#allocation3 + $0x10] sm:$0xff]
    %v59 = vld [vmem:[#allocation3 + $0x18] sm:$0xff]
    %v60 = vld [vmem:[#allocation3 + $0x20] sm:$0xff]
    %v61 = vld [vmem:[#allocation3 + $0x28] sm:$0xff]
    %v62 = vld [vmem:[#allocation3 + $0x30] sm:$0xff]
    %v63 = vld [vmem:[#allocation3 + $0x38] sm:$0xff]
    %v64 = vld [vmem:[#allocation3 + $0x40] sm:$0xff]
    %v65 = vld [vmem:[#allocation3 + $0x48] sm:$0xff]
    %v66 = vld [vmem:[#allocation3 + $0x50] sm:$0xff]
    %v67 = vld [vmem:[#allocation3 + $0x58] sm:$0xff]
    %v68 = vld [vmem:[#allocation3 + $0x60] sm:$0xff]
    %v69 = vld [vmem:[#allocation3 + $0x68] sm:$0xff]
    %v70 = vld [vmem:[#allocation3 + $0x70] sm:$0xff]
    %v71 = vld [vmem:[#allocation3 + $0x78] sm:$0xff]
    %v72 = vld [vmem:[#allocation3 + $0x80] sm:$0xff]
    %v73 = vld [vmem:[#allocation3 + $0x88] sm:$0xff]
    %v74 = vld [vmem:[#allocation3 + $0x90] sm:$0xff]
    %v75 = vld [vmem:[#allocation3 + $0x98] sm:$0xff]
    %v76 = vld [vmem:[#allocation3 + $0xa0] sm:$0xff]
    %v77 = vld [vmem:[#allocation3 + $0xa8] sm:$0xff]
    %v78 = vld [vmem:[#allocation3 + $0xb0] sm:$0xff]
    %v79 = vld [vmem:[#allocation3 + $0xb8] sm:$0xff]
    %v80 = vld [vmem:[#allocation3 + $0xc0] sm:$0xff]
    %v81 = vld [vmem:[#allocation3 + $0xc8] sm:$0xff]
    %v82 = vld [vmem:[#allocation3 + $0xd0] sm:$0xff]
    %v83 = vld [vmem:[#allocation3 + $0xd8] sm:$0xff]
    %v84 = vld [vmem:[#allocation3 + $0xe0] sm:$0xff]
    %v85 = vld [vmem:[#allocation3 + $0xe8] sm:$0xff]
    %v86 = vld [vmem:[#allocation3 + $0xf0] sm:$0xff]
    %v87 = vld [vmem:[#allocation3 + $0xf8] sm:$0xff]
    %v88 = vld [vmem:[#allocation3 + $0x100] sm:$0xff]
    %v89 = vld [vmem:[#allocation3 + $0x108] sm:$0xff]
    %v90 = vld [vmem:[#allocation3 + $0x110] sm:$0xff]
    %v91 = vld [vmem:[#allocation3 + $0x118] sm:$0xff]
    %v92 = vld [vmem:[#allocation3 + $0x120] sm:$0xff]
    %v93 = vld [vmem:[#allocation3 + $0x128] sm:$0xff]
    %v94 = vld [vmem:[#allocation3 + $0x130] sm:$0xff]
    %v95 = vld [vmem:[#allocation3 + $0x138] sm:$0xff]
    %v96 = vld [vmem:[#allocation3 + $0x140] sm:$0xff]
    %v97 = vld [vmem:[#allocation3 + $0x148] sm:$0xff]
    %v98 = vld [vmem:[#allocation3 + $0x150] sm:$0xff]
    %v99 = vld [vmem:[#allocation3 + $0x158] sm:$0xff]
    %v100 = vld [vmem:[#allocation3 + $0x160] sm:$0xff]
    %v101 = vld [vmem:[#allocation3 + $0x168] sm:$0xff]
    %v102 = vld [vmem:[#allocation3 + $0x170] sm:$0xff]
    %v103 = vld [vmem:[#allocation3 + $0x178] sm:$0xff]
    %v104 = vld [vmem:[#allocation3 + $0x180] sm:$0xff]
    %v105 = vld [vmem:[#allocation3 + $0x188] sm:$0xff]
    %v106 = vld [vmem:[#allocation3 + $0x190] sm:$0xff]
    %v107 = vld [vmem:[#allocation3 + $0x198] sm:$0xff]
    %v108 = vld [vmem:[#allocation3 + $0x1a0] sm:$0xff]
    %v109 = vld [vmem:[#allocation3 + $0x1a8] sm:$0xff]
    %v110 = vld [vmem:[#allocation3 + $0x1b0] sm:$0xff]
    %v111 = vld [vmem:[#allocation3 + $0x1b8] sm:$0xff]
    %v112 = vld [vmem:[#allocation3 + $0x1c0] sm:$0xff]
    %v113 = vld [vmem:[#allocation3 + $0x1c8] sm:$0xff]
    %v114 = vld [vmem:[#allocation3 + $0x1d0] sm:$0xff]
    %v115 = vld [vmem:[#allocation3 + $0x1d8] sm:$0xff]
    %v116 = vld [vmem:[#allocation3 + $0x1e0] sm:$0xff]
    %v117 = vld [vmem:[#allocation3 + $0x1e8] sm:$0xff]
    %v118 = vld [vmem:[#allocation3 + $0x1f0] sm:$0xff]
    %v119 = vld [vmem:[#allocation3 + $0x1f8] sm:$0xff]
    %v120 = vld [vmem:[#allocation3 + $0x200] sm:$0xff]
    %v121 = vld [vmem:[#allocation3 + $0x208] sm:$0xff]
    %v122 = vld [vmem:[#allocation3 + $0x210] sm:$0xff]
    %v123 = vld [vmem:[#allocation3 + $0x218] sm:$0xff]
    %v124 = vld [vmem:[#allocation3 + $0x220] sm:$0xff]
    %v125 = vld [vmem:[#allocation3 + $0x228] sm:$0xff]
    %v126 = vld [vmem:[#allocation3 + $0x230] sm:$0xff]
    %v127 = vld [vmem:[#allocation3 + $0x238] sm:$0xff]
    %v128 = vld [vmem:[#allocation3 + $0x240] sm:$0xff]
    %v129 = vld [vmem:[#allocation3 + $0x248] sm:$0xff]
    %v130 = vld [vmem:[#allocation3 + $0x250] sm:$0xff]
    %v131 = vld [vmem:[#allocation3 + $0x258] sm:$0xff]
    %v132 = vld [vmem:[#allocation3 + $0x260] sm:$0xff]
    %v133 = vld [vmem:[#allocation3 + $0x268] sm:$0xff]
    %v134 = vld [vmem:[#allocation3 + $0x270] sm:$0xff]
    %v135 = vld [vmem:[#allocation3 + $0x278] sm:$0xff]
    %v136 = vld [vmem:[#allocation3 + $0x280] sm:$0xff]
    %v137 = vld [vmem:[#allocation3 + $0x288] sm:$0xff]
    %v138 = vld [vmem:[#allocation3 + $0x290] sm:$0xff]
    %v139 = vld [vmem:[#allocation3 + $0x298] sm:$0xff]
    %v140 = vld [vmem:[#allocation3 + $0x2a0] sm:$0xff]
    %v141 = vld [vmem:[#allocation3 + $0x2a8] sm:$0xff]
    %v142 = vld [vmem:[#allocation3 + $0x2b0] sm:$0xff]
    %v143 = vld [vmem:[#allocation3 + $0x2b8] sm:$0xff]
    %v144 = vld [vmem:[#allocation3 + $0x2c0] sm:$0xff]
    %v145 = vld [vmem:[#allocation3 + $0x2c8] sm:$0xff]
    %v146 = vld [vmem:[#allocation3 + $0x2d0] sm:$0xff]
    %v147 = vld [vmem:[#allocation3 + $0x2d8] sm:$0xff]
    %v148 = vld [vmem:[#allocation3 + $0x2e0] sm:$0xff]
    %v149 = vld [vmem:[#allocation3 + $0x2e8] sm:$0xff]
    %v150 = vld [vmem:[#allocation3 + $0x2f0] sm:$0xff]
    %v151 = vld [vmem:[#allocation3 + $0x2f8] sm:$0xff]
    %v152 = vld [vmem:[%s2] sm:$0x3]
    %v154 = vperm.slane %v152, 0
    %v155 = vperm.slane %v152, 1
    %v254 = vunpack.c.l.b16 %v56
    %v255 = vunpack.c.h.b16 %v56
    %v256 = vunpack.c.l.b16 %v57
    %v257 = vunpack.c.h.b16 %v57
    %v258 = vunpack.c.l.b16 %v58
    %v259 = vunpack.c.h.b16 %v58
    %v260 = vunpack.c.l.b16 %v59
    %v261 = vunpack.c.h.b16 %v59
    %v262 = vunpack.c.l.b16 %v60
    %v263 = vunpack.c.h.b16 %v60
    %v264 = vunpack.c.l.b16 %v61
    %v265 = vunpack.c.h.b16 %v61
    %v266 = vunpack.c.l.b16 %v62
    %v267 = vunpack.c.h.b16 %v62
    %v268 = vunpack.c.l.b16 %v63
    %v269 = vunpack.c.h.b16 %v63
    %v270 = vunpack.c.l.b16 %v64
    %v271 = vunpack.c.h.b16 %v64
    %v272 = vunpack.c.l.b16 %v65
    %v273 = vunpack.c.h.b16 %v65
    %v274 = vunpack.c.l.b16 %v66
    %v275 = vunpack.c.h.b16 %v66
    %v276 = vunpack.c.l.b16 %v67
    %v277 = vunpack.c.h.b16 %v67
    %v278 = vunpack.c.l.b16 %v68
    %v279 = vunpack.c.h.b16 %v68
    %v280 = vunpack.c.l.b16 %v69
    %v281 = vunpack.c.h.b16 %v69
    %v282 = vunpack.c.l.b16 %v70
    %v283 = vunpack.c.h.b16 %v70
    %v284 = vunpack.c.l.b16 %v71
    %v285 = vunpack.c.h.b16 %v71
    %v286 = vunpack.c.l.b16 %v72
    %v287 = vunpack.c.h.b16 %v72
    %v288 = vunpack.c.l.b16 %v73
    %v289 = vunpack.c.h.b16 %v73
    %v290 = vunpack.c.l.b16 %v74
    %v291 = vunpack.c.h.b16 %v74
    %v292 = vunpack.c.l.b16 %v75
    %v293 = vunpack.c.h.b16 %v75
    %v294 = vunpack.c.l.b16 %v76
    %v295 = vunpack.c.h.b16 %v76
    %v296 = vunpack.c.l.b16 %v77
    %v297 = vunpack.c.h.b16 %v77
    %v298 = vunpack.c.l.b16 %v78
    %v299 = vunpack.c.h.b16 %v78
    %v300 = vunpack.c.l.b16 %v79
    %v301 = vunpack.c.h.b16 %v79
    %v302 = vunpack.c.l.b16 %v80
    %v303 = vunpack.c.h.b16 %v80
    %v304 = vunpack.c.l.b16 %v81
    %v305 = vunpack.c.h.b16 %v81
    %v306 = vunpack.c.l.b16 %v82
    %v307 = vunpack.c.h.b16 %v82
    %v308 = vunpack.c.l.b16 %v83
    %v309 = vunpack.c.h.b16 %v83
    %v310 = vunpack.c.l.b16 %v84
    %v311 = vunpack.c.h.b16 %v84
    %v312 = vunpack.c.l.b16 %v85
    %v313 = vunpack.c.h.b16 %v85
    %v314 = vunpack.c.l.b16 %v86
    %v315 = vunpack.c.h.b16 %v86
    %v316 = vunpack.c.l.b16 %v87
    %v317 = vunpack.c.h.b16 %v87
    %v318 = vunpack.c.l.b16 %v88
    %v319 = vunpack.c.h.b16 %v88
    %v320 = vunpack.c.l.b16 %v89
    %v321 = vunpack.c.h.b16 %v89
    %v322 = vunpack.c.l.b16 %v90
    %v323 = vunpack.c.h.b16 %v90
    %v324 = vunpack.c.l.b16 %v91
    %v325 = vunpack.c.h.b16 %v91
    %v326 = vunpack.c.l.b16 %v92
    %v327 = vunpack.c.h.b16 %v92
    %v328 = vunpack.c.l.b16 %v93
    %v329 = vunpack.c.h.b16 %v93
    %v330 = vunpack.c.l.b16 %v94
    %v331 = vunpack.c.h.b16 %v94
    %v332 = vunpack.c.l.b16 %v95
    %v333 = vunpack.c.h.b16 %v95
    %v334 = vunpack.c.l.b16 %v96
    %v335 = vunpack.c.h.b16 %v96
    %v336 = vunpack.c.l.b16 %v97
    %v337 = vunpack.c.h.b16 %v97
    %v338 = vunpack.c.l.b16 %v98
    %v339 = vunpack.c.h.b16 %v98
    %v340 = vunpack.c.l.b16 %v99
    %v341 = vunpack.c.h.b16 %v99
    %v342 = vunpack.c.l.b16 %v100
    %v343 = vunpack.c.h.b16 %v100
    %v344 = vunpack.c.l.b16 %v101
    %v345 = vunpack.c.h.b16 %v101
    %v346 = vunpack.c.l.b16 %v102
    %v347 = vunpack.c.h.b16 %v102
    %v348 = vunpack.c.l.b16 %v103
    %v349 = vunpack.c.h.b16 %v103
    %v350 = vunpack.c.l.b16 %v104
    %v351 = vunpack.c.h.b16 %v104
    %v352 = vunpack.c.l.b16 %v105
    %v353 = vunpack.c.h.b16 %v105
    %v354 = vunpack.c.l.b16 %v106
    %v355 = vunpack.c.h.b16 %v106
    %v356 = vunpack.c.l.b16 %v107
    %v357 = vunpack.c.h.b16 %v107
    %v358 = vunpack.c.l.b16 %v108
    %v359 = vunpack.c.h.b16 %v108
    %v360 = vunpack.c.l.b16 %v109
    %v361 = vunpack.c.h.b16 %v109
    %v362 = vunpack.c.l.b16 %v110
    %v363 = vunpack.c.h.b16 %v110
    %v364 = vunpack.c.l.b16 %v111
    %v365 = vunpack.c.h.b16 %v111
    %v366 = vunpack.c.l.b16 %v112
    %v367 = vunpack.c.h.b16 %v112
    %v368 = vunpack.c.l.b16 %v113
    %v369 = vunpack.c.h.b16 %v113
    %v370 = vunpack.c.l.b16 %v114
    %v371 = vunpack.c.h.b16 %v114
    %v372 = vunpack.c.l.b16 %v115
    %v373 = vunpack.c.h.b16 %v115
    %v374 = vunpack.c.l.b16 %v116
    %v375 = vunpack.c.h.b16 %v116
    %v376 = vunpack.c.l.b16 %v117
    %v377 = vunpack.c.h.b16 %v117
    %v378 = vunpack.c.l.b16 %v118
    %v379 = vunpack.c.h.b16 %v118
    %v380 = vunpack.c.l.b16 %v119
    %v381 = vunpack.c.h.b16 %v119
    %v382 = vunpack.c.l.b16 %v120
    %v383 = vunpack.c.h.b16 %v120
    %v384 = vunpack.c.l.b16 %v121
    %v385 = vunpack.c.h.b16 %v121
    %v386 = vunpack.c.l.b16 %v122
    %v387 = vunpack.c.h.b16 %v122
    %v388 = vunpack.c.l.b16 %v123
    %v389 = vunpack.c.h.b16 %v123
    %v390 = vunpack.c.l.b16 %v124
    %v391 = vunpack.c.h.b16 %v124
    %v392 = vunpack.c.l.b16 %v125
    %v393 = vunpack.c.h.b16 %v125
    %v394 = vunpack.c.l.b16 %v126
    %v395 = vunpack.c.h.b16 %v126
    %v396 = vunpack.c.l.b16 %v127
    %v397 = vunpack.c.h.b16 %v127
    %v398 = vunpack.c.l.b16 %v128
    %v399 = vunpack.c.h.b16 %v128
    %v400 = vunpack.c.l.b16 %v129
    %v401 = vunpack.c.h.b16 %v129
    %v402 = vunpack.c.l.b16 %v130
    %v403 = vunpack.c.h.b16 %v130
    %v404 = vunpack.c.l.b16 %v131
    %v405 = vunpack.c.h.b16 %v131
    %v406 = vunpack.c.l.b16 %v132
    %v407 = vunpack.c.h.b16 %v132
    %v408 = vunpack.c.l.b16 %v133
    %v409 = vunpack.c.h.b16 %v133
    %v410 = vunpack.c.l.b16 %v134
    %v411 = vunpack.c.h.b16 %v134
    %v412 = vunpack.c.l.b16 %v135
    %v413 = vunpack.c.h.b16 %v135
    %v414 = vunpack.c.l.b16 %v136
    %v415 = vunpack.c.h.b16 %v136
    %v416 = vunpack.c.l.b16 %v137
    %v417 = vunpack.c.h.b16 %v137
    %v418 = vunpack.c.l.b16 %v138
    %v419 = vunpack.c.h.b16 %v138
    %v420 = vunpack.c.l.b16 %v139
    %v421 = vunpack.c.h.b16 %v139
    %v422 = vunpack.c.l.b16 %v140
    %v423 = vunpack.c.h.b16 %v140
    %v424 = vunpack.c.l.b16 %v141
    %v425 = vunpack.c.h.b16 %v141
    %v426 = vunpack.c.l.b16 %v142
    %v427 = vunpack.c.h.b16 %v142
    %v428 = vunpack.c.l.b16 %v143
    %v429 = vunpack.c.h.b16 %v143
    %v430 = vunpack.c.l.b16 %v144
    %v431 = vunpack.c.h.b16 %v144
    %v432 = vunpack.c.l.b16 %v145
    %v433 = vunpack.c.h.b16 %v145
    %v434 = vunpack.c.l.b16 %v146
    %v435 = vunpack.c.h.b16 %v146
    %v436 = vunpack.c.l.b16 %v147
    %v437 = vunpack.c.h.b16 %v147
    %v438 = vunpack.c.l.b16 %v148
    %v439 = vunpack.c.h.b16 %v148
    %v440 = vunpack.c.l.b16 %v149
    %v441 = vunpack.c.h.b16 %v149
    %v442 = vunpack.c.l.b16 %v150
    %v443 = vunpack.c.h.b16 %v150
    %v444 = vunpack.c.l.b16 %v151
    %v445 = vunpack.c.h.b16 %v151
    %v446 = vpack.c.b16 %v256, %v254
    %v447 = vpack.c.b16 %v257, %v255
    %v448 = vpack.c.b16 %v260, %v258
    %v449 = vpack.c.b16 %v261, %v259
    %v450 = vpack.c.b16 %v264, %v262
    %v451 = vpack.c.b16 %v265, %v263
    %v452 = vpack.c.b16 %v268, %v266
    %v453 = vpack.c.b16 %v269, %v267
    %v454 = vpack.c.b16 %v272, %v270
    %v455 = vpack.c.b16 %v273, %v271
    %v456 = vpack.c.b16 %v276, %v274
    %v457 = vpack.c.b16 %v277, %v275
    %v458 = vpack.c.b16 %v280, %v278
    %v459 = vpack.c.b16 %v281, %v279
    %v460 = vpack.c.b16 %v284, %v282
    %v461 = vpack.c.b16 %v285, %v283
    %v462 = vpack.c.b16 %v288, %v286
    %v463 = vpack.c.b16 %v289, %v287
    %v464 = vpack.c.b16 %v292, %v290
    %v465 = vpack.c.b16 %v293, %v291
    %v466 = vpack.c.b16 %v296, %v294
    %v467 = vpack.c.b16 %v297, %v295
    %v468 = vpack.c.b16 %v300, %v298
    %v469 = vpack.c.b16 %v301, %v299
    %v470 = vpack.c.b16 %v304, %v302
    %v471 = vpack.c.b16 %v305, %v303
    %v472 = vpack.c.b16 %v308, %v306
    %v473 = vpack.c.b16 %v309, %v307
    %v474 = vpack.c.b16 %v312, %v310
    %v475 = vpack.c.b16 %v313, %v311
    %v476 = vpack.c.b16 %v316, %v314
    %v477 = vpack.c.b16 %v317, %v315
    %v478 = vpack.c.b16 %v320, %v318
    %v479 = vpack.c.b16 %v321, %v319
    %v480 = vpack.c.b16 %v324, %v322
    %v481 = vpack.c.b16 %v325, %v323
    %v482 = vpack.c.b16 %v328, %v326
    %v483 = vpack.c.b16 %v329, %v327
    %v484 = vpack.c.b16 %v332, %v330
    %v485 = vpack.c.b16 %v333, %v331
    %v486 = vpack.c.b16 %v336, %v334
    %v487 = vpack.c.b16 %v337, %v335
    %v488 = vpack.c.b16 %v340, %v338
    %v489 = vpack.c.b16 %v341, %v339
    %v490 = vpack.c.b16 %v344, %v342
    %v491 = vpack.c.b16 %v345, %v343
    %v492 = vpack.c.b16 %v348, %v346
    %v493 = vpack.c.b16 %v349, %v347
    %v494 = vpack.c.b16 %v352, %v350
    %v495 = vpack.c.b16 %v353, %v351
    %v496 = vpack.c.b16 %v356, %v354
    %v497 = vpack.c.b16 %v357, %v355
    %v498 = vpack.c.b16 %v360, %v358
    %v499 = vpack.c.b16 %v361, %v359
    %v500 = vpack.c.b16 %v364, %v362
    %v501 = vpack.c.b16 %v365, %v363
    %v502 = vpack.c.b16 %v368, %v366
    %v503 = vpack.c.b16 %v369, %v367
    %v504 = vpack.c.b16 %v372, %v370
    %v505 = vpack.c.b16 %v373, %v371
    %v506 = vpack.c.b16 %v376, %v374
    %v507 = vpack.c.b16 %v377, %v375
    %v508 = vpack.c.b16 %v380, %v378
    %v509 = vpack.c.b16 %v381, %v379
    %v510 = vpack.c.b16 %v384, %v382
    %v511 = vpack.c.b16 %v385, %v383
    %v512 = vpack.c.b16 %v388, %v386
    %v513 = vpack.c.b16 %v389, %v387
    %v514 = vpack.c.b16 %v392, %v390
    %v515 = vpack.c.b16 %v393, %v391
    %v516 = vpack.c.b16 %v396, %v394
    %v517 = vpack.c.b16 %v397, %v395
    %v518 = vpack.c.b16 %v400, %v398
    %v519 = vpack.c.b16 %v401, %v399
    %v520 = vpack.c.b16 %v404, %v402
    %v521 = vpack.c.b16 %v405, %v403
    %v522 = vpack.c.b16 %v408, %v406
    %v523 = vpack.c.b16 %v409, %v407
    %v524 = vpack.c.b16 %v412, %v410
    %v525 = vpack.c.b16 %v413, %v411
    %v526 = vpack.c.b16 %v416, %v414
    %v527 = vpack.c.b16 %v417, %v415
    %v528 = vpack.c.b16 %v420, %v418
    %v529 = vpack.c.b16 %v421, %v419
    %v530 = vpack.c.b16 %v424, %v422
    %v531 = vpack.c.b16 %v425, %v423
    %v532 = vpack.c.b16 %v428, %v426
    %v533 = vpack.c.b16 %v429, %v427
    %v534 = vpack.c.b16 %v432, %v430
    %v535 = vpack.c.b16 %v433, %v431
    %v536 = vpack.c.b16 %v436, %v434
    %v537 = vpack.c.b16 %v437, %v435
    %v538 = vpack.c.b16 %v440, %v438
    %v539 = vpack.c.b16 %v441, %v439
    %v540 = vpack.c.b16 %v444, %v442
    %v541 = vpack.c.b16 %v445, %v443
    %638 = vmatpush.bf16.msra.mxu0 %v460
    %639 = vmatpush.bf16.msra.mxu0 %v458
    %640 = vmatpush.bf16.msra.mxu0 %v456
    %641 = vmatpush.bf16.msra.mxu0 %v454
    %642 = vmatpush.bf16.msra.mxu0 %v452
    %643 = vmatpush.bf16.msra.mxu0 %v450
    %644 = vmatpush.bf16.msra.mxu0 %v448
    %645 = vmatpush.bf16.msra.mxu0 %v446
    %646 = vmatmul.bf16.gmra.mxu0 %v50
    %v647 = vpop.f32.mrf.mxu0
    %v648 = vadd.f32 %v154, %v647
    %v649 = vpop.f32.mrf.mxu0
    %650 = vdwg.mxu0
    %651 = vmatpush.bf16.msra.mxu0 %v476
    %652 = vmatpush.bf16.msra.mxu0 %v474
    %653 = vmatpush.bf16.msra.mxu0 %v472
    %654 = vmatpush.bf16.msra.mxu0 %v470
    %655 = vmatpush.bf16.msra.mxu0 %v468
    %656 = vmatpush.bf16.msra.mxu0 %v466
    %657 = vmatpush.bf16.msra.mxu0 %v464
    %658 = vmatpush.bf16.msra.mxu0 %v462
    %659 = vmatmul.bf16.gmra.mxu0 %v51
    %v660 = vpop.f32.mrf.mxu0
    %v661 = vadd.f32 %v648, %v660
    %v662 = vpop.f32.mrf.mxu0
    %663 = vdwg.mxu0
    %664 = vmatpush.bf16.msra.mxu0 %v492
    %665 = vmatpush.bf16.msra.mxu0 %v490
    %666 = vmatpush.bf16.msra.mxu0 %v488
    %667 = vmatpush.bf16.msra.mxu0 %v486
    %668 = vmatpush.bf16.msra.mxu0 %v484
    %669 = vmatpush.bf16.msra.mxu0 %v482
    %670 = vmatpush.bf16.msra.mxu0 %v480
    %671 = vmatpush.bf16.msra.mxu0 %v478
    %672 = vmatmul.bf16.gmra.mxu0 %v52
    %v673 = vpop.f32.mrf.mxu0
    %v674 = vadd.f32 %v661, %v673
    %v675 = vpop.f32.mrf.mxu0
    %676 = vdwg.mxu0
    %677 = vmatpush.bf16.msra.mxu0 %v508
    %678 = vmatpush.bf16.msra.mxu0 %v506
    %679 = vmatpush.bf16.msra.mxu0 %v504
    %680 = vmatpush.bf16.msra.mxu0 %v502
    %681 = vmatpush.bf16.msra.mxu0 %v500
    %682 = vmatpush.bf16.msra.mxu0 %v498
    %683 = vmatpush.bf16.msra.mxu0 %v496
    %684 = vmatpush.bf16.msra.mxu0 %v494
    %685 = vmatmul.bf16.gmra.mxu0 %v53
    %v686 = vpop.f32.mrf.mxu0
    %v687 = vadd.f32 %v674, %v686
    %v688 = vpop.f32.mrf.mxu0
    %689 = vdwg.mxu0
    %690 = vmatpush.bf16.msra.mxu0 %v524
    %691 = vmatpush.bf16.msra.mxu0 %v522
    %692 = vmatpush.bf16.msra.mxu0 %v520
    %693 = vmatpush.bf16.msra.mxu0 %v518
    %694 = vmatpush.bf16.msra.mxu0 %v516
    %695 = vmatpush.bf16.msra.mxu0 %v514
    %696 = vmatpush.bf16.msra.mxu0 %v512
    %697 = vmatpush.bf16.msra.mxu0 %v510
    %698 = vmatmul.bf16.gmra.mxu0 %v54
    %v699 = vpop.f32.mrf.mxu0
    %v700 = vadd.f32 %v687, %v699
    %v701 = vpop.f32.mrf.mxu0
    %702 = vdwg.mxu0
    %703 = vmatpush.bf16.msra.mxu0 %v540
    %704 = vmatpush.bf16.msra.mxu0 %v538
    %705 = vmatpush.bf16.msra.mxu0 %v536
    %706 = vmatpush.bf16.msra.mxu0 %v534
    %707 = vmatpush.bf16.msra.mxu0 %v532
    %708 = vmatpush.bf16.msra.mxu0 %v530
    %709 = vmatpush.bf16.msra.mxu0 %v528
    %710 = vmatpush.bf16.msra.mxu0 %v526
    %711 = vmatmul.bf16.gmra.mxu0 %v55
    %v712 = vpop.f32.mrf.mxu0
    %v713 = vadd.f32 %v700, %v712
    %v714 = vpop.f32.mrf.mxu0
    %715 = vdwg.mxu0
    %716 = vmatpush.bf16.msra.mxu0 %v461
    %717 = vmatpush.bf16.msra.mxu0 %v459
    %718 = vmatpush.bf16.msra.mxu0 %v457
    %719 = vmatpush.bf16.msra.mxu0 %v455
    %720 = vmatpush.bf16.msra.mxu0 %v453
    %721 = vmatpush.bf16.msra.mxu0 %v451
    %722 = vmatpush.bf16.msra.mxu0 %v449
    %723 = vmatpush.bf16.msra.mxu0 %v447
    %724 = vmatmul.bf16.gmra.mxu0 %v50
    %v725 = vpop.f32.mrf.mxu0
    %v726 = vadd.f32 %v155, %v725
    %v727 = vpop.f32.mrf.mxu0
    %728 = vdwg.mxu0
    %729 = vmatpush.bf16.msra.mxu0 %v477
    %730 = vmatpush.bf16.msra.mxu0 %v475
    %731 = vmatpush.bf16.msra.mxu0 %v473
    %732 = vmatpush.bf16.msra.mxu0 %v471
    %733 = vmatpush.bf16.msra.mxu0 %v469
    %734 = vmatpush.bf16.msra.mxu0 %v467
    %735 = vmatpush.bf16.msra.mxu0 %v465
    %736 = vmatpush.bf16.msra.mxu0 %v463
    %737 = vmatmul.bf16.gmra.mxu0 %v51
    %v738 = vpop.f32.mrf.mxu0
    %v739 = vadd.f32 %v726, %v738
    %v740 = vpop.f32.mrf.mxu0
    %741 = vdwg.mxu0
    %742 = vmatpush.bf16.msra.mxu0 %v493
    %743 = vmatpush.bf16.msra.mxu0 %v491
    %744 = vmatpush.bf16.msra.mxu0 %v489
    %745 = vmatpush.bf16.msra.mxu0 %v487
    %746 = vmatpush.bf16.msra.mxu0 %v485
    %747 = vmatpush.bf16.msra.mxu0 %v483
    %748 = vmatpush.bf16.msra.mxu0 %v481
    %749 = vmatpush.bf16.msra.mxu0 %v479
    %750 = vmatmul.bf16.gmra.mxu0 %v52
    %v751 = vpop.f32.mrf.mxu0
    %v752 = vadd.f32 %v739, %v751
    %v753 = vpop.f32.mrf.mxu0
    %754 = vdwg.mxu0
    %755 = vmatpush.bf16.msra.mxu0 %v509
    %756 = vmatpush.bf16.msra.mxu0 %v507
    %757 = vmatpush.bf16.msra.mxu0 %v505
    %758 = vmatpush.bf16.msra.mxu0 %v503
    %759 = vmatpush.bf16.msra.mxu0 %v501
    %760 = vmatpush.bf16.msra.mxu0 %v499
    %761 = vmatpush.bf16.msra.mxu0 %v497
    %762 = vmatpush.bf16.msra.mxu0 %v495
    %763 = vmatmul.bf16.gmra.mxu0 %v53
    %v764 = vpop.f32.mrf.mxu0
    %v765 = vadd.f32 %v752, %v764
    %v766 = vpop.f32.mrf.mxu0
    %767 = vdwg.mxu0
    %768 = vmatpush.bf16.msra.mxu0 %v525
    %769 = vmatpush.bf16.msra.mxu0 %v523
    %770 = vmatpush.bf16.msra.mxu0 %v521
    %771 = vmatpush.bf16.msra.mxu0 %v519
    %772 = vmatpush.bf16.msra.mxu0 %v517
    %773 = vmatpush.bf16.msra.mxu0 %v515
    %774 = vmatpush.bf16.msra.mxu0 %v513
    %775 = vmatpush.bf16.msra.mxu0 %v511
    %776 = vmatmul.bf16.gmra.mxu0 %v54
    %v777 = vpop.f32.mrf.mxu0
    %v778 = vadd.f32 %v765, %v777
    %v779 = vpop.f32.mrf.mxu0
    %780 = vdwg.mxu0
    %781 = vmatpush.bf16.msra.mxu0 %v541
    %782 = vmatpush.bf16.msra.mxu0 %v539
    %783 = vmatpush.bf16.msra.mxu0 %v537
    %784 = vmatpush.bf16.msra.mxu0 %v535
    %785 = vmatpush.bf16.msra.mxu0 %v533
    %786 = vmatpush.bf16.msra.mxu0 %v531
    %787 = vmatpush.bf16.msra.mxu0 %v529
    %788 = vmatpush.bf16.msra.mxu0 %v527
    %789 = vmatmul.bf16.gmra.mxu0 %v55
    %v790 = vpop.f32.mrf.mxu0
    %v791 = vadd.f32 %v778, %v790
    %v792 = vpop.f32.mrf.mxu0
    %793 = vdwg.mxu0
    %v794 = vmax.f32 %v713, 0.0
    %v795 = vmax.f32 %v791, 0.0
    %v796 = vpack.c.bf16 %v794, %v794
    %v797 = vpack.c.bf16 %v795, %v795
    %v798 = vld [vmem:[%s3] sm:$0xf]
    %v799 = vld [vmem:[%s3 + $0x4] sm:$0xf]
    %v800 = vld [vmem:[%s3 + $0x8] sm:$0xf]
    %v801 = vld [vmem:[%s3 + $0xc] sm:$0xf]
    %v802 = vld [vmem:[%s3 + $0x10] sm:$0xf]
    %v803 = vld [vmem:[%s3 + $0x14] sm:$0xf]
    %v804 = vld [vmem:[%s3 + $0x18] sm:$0xf]
    %v805 = vld [vmem:[%s3 + $0x1c] sm:$0xf]
    %v806 = vld [vmem:[%s3 + $0x20] sm:$0xf]
    %v807 = vld [vmem:[%s3 + $0x24] sm:$0xf]
    %v808 = vld [vmem:[%s3 + $0x28] sm:$0xf]
    %v809 = vld [vmem:[%s3 + $0x2c] sm:$0xf]
    %v810 = vld [vmem:[%s3 + $0x30] sm:$0xf]
    %v811 = vld [vmem:[%s3 + $0x34] sm:$0xf]
    %v812 = vld [vmem:[%s3 + $0x38] sm:$0xf]
    %v813 = vld [vmem:[%s3 + $0x3c] sm:$0xf]
    %v814 = vld [vmem:[%s3 + $0x40] sm:$0xf]
    %v815 = vld [vmem:[%s3 + $0x44] sm:$0xf]
    %v816 = vld [vmem:[%s3 + $0x48] sm:$0xf]
    %v817 = vld [vmem:[%s3 + $0x4c] sm:$0xf]
    %v818 = vld [vmem:[%s3 + $0x50] sm:$0xf]
    %v819 = vld [vmem:[%s3 + $0x54] sm:$0xf]
    %v820 = vld [vmem:[%s3 + $0x58] sm:$0xf]
    %v821 = vld [vmem:[%s3 + $0x5c] sm:$0xf]
    %v822 = vld [vmem:[%s3 + $0x60] sm:$0xf]
    %v823 = vld [vmem:[%s3 + $0x64] sm:$0xf]
    %v824 = vld [vmem:[%s3 + $0x68] sm:$0xf]
    %v825 = vld [vmem:[%s3 + $0x6c] sm:$0xf]
    %v826 = vld [vmem:[%s3 + $0x70] sm:$0xf]
    %v827 = vld [vmem:[%s3 + $0x74] sm:$0xf]
    %v828 = vld [vmem:[%s3 + $0x78] sm:$0xf]
    %v829 = vld [vmem:[%s3 + $0x7c] sm:$0xf]
    %v830 = vld [vmem:[%s4] sm:$0x1]
    %v832 = vperm.slane %v830, 0
    %v866 = vunpack.c.l.b16 %v798
    %v867 = vunpack.c.l.b16 %v799
    %v868 = vunpack.c.l.b16 %v800
    %v869 = vunpack.c.l.b16 %v801
    %v870 = vunpack.c.l.b16 %v802
    %v871 = vunpack.c.l.b16 %v803
    %v872 = vunpack.c.l.b16 %v804
    %v873 = vunpack.c.l.b16 %v805
    %v874 = vunpack.c.l.b16 %v806
    %v875 = vunpack.c.l.b16 %v807
    %v876 = vunpack.c.l.b16 %v808
    %v877 = vunpack.c.l.b16 %v809
    %v878 = vunpack.c.l.b16 %v810
    %v879 = vunpack.c.l.b16 %v811
    %v880 = vunpack.c.l.b16 %v812
    %v881 = vunpack.c.l.b16 %v813
    %v882 = vunpack.c.l.b16 %v814
    %v883 = vunpack.c.l.b16 %v815
    %v884 = vunpack.c.l.b16 %v816
    %v885 = vunpack.c.l.b16 %v817
    %v886 = vunpack.c.l.b16 %v818
    %v887 = vunpack.c.l.b16 %v819
    %v888 = vunpack.c.l.b16 %v820
    %v889 = vunpack.c.l.b16 %v821
    %v890 = vunpack.c.l.b16 %v822
    %v891 = vunpack.c.l.b16 %v823
    %v892 = vunpack.c.l.b16 %v824
    %v893 = vunpack.c.l.b16 %v825
    %v894 = vunpack.c.l.b16 %v826
    %v895 = vunpack.c.l.b16 %v827
    %v896 = vunpack.c.l.b16 %v828
    %v897 = vunpack.c.l.b16 %v829
    %v898 = vpack.c.b16 %v867, %v866
    %v899 = vpack.c.b16 %v869, %v868
    %v900 = vpack.c.b16 %v871, %v870
    %v901 = vpack.c.b16 %v873, %v872
    %v902 = vpack.c.b16 %v875, %v874
    %v903 = vpack.c.b16 %v877, %v876
    %v904 = vpack.c.b16 %v879, %v878
    %v905 = vpack.c.b16 %v881, %v880
    %v906 = vpack.c.b16 %v883, %v882
    %v907 = vpack.c.b16 %v885, %v884
    %v908 = vpack.c.b16 %v887, %v886
    %v909 = vpack.c.b16 %v889, %v888
    %v910 = vpack.c.b16 %v891, %v890
    %v911 = vpack.c.b16 %v893, %v892
    %v912 = vpack.c.b16 %v895, %v894
    %v913 = vpack.c.b16 %v897, %v896
    %930 = vmatpush.bf16.msra.mxu0 %v905
    %931 = vmatpush.bf16.msra.mxu0 %v904
    %932 = vmatpush.bf16.msra.mxu0 %v903
    %933 = vmatpush.bf16.msra.mxu0 %v902
    %934 = vmatpush.bf16.msra.mxu0 %v901
    %935 = vmatpush.bf16.msra.mxu0 %v900
    %936 = vmatpush.bf16.msra.mxu0 %v899
    %937 = vmatpush.bf16.msra.mxu0 %v898
    %938 = vmatmul.bf16.gmra.mxu0 %v796
    %v939 = vpop.f32.mrf.mxu0
    %v940 = vadd.f32 %v832, %v939
    %v941 = vpop.f32.mrf.mxu0
    %942 = vdwg.mxu0
    %943 = vmatpush.bf16.msra.mxu0 %v913
    %944 = vmatpush.bf16.msra.mxu0 %v912
    %945 = vmatpush.bf16.msra.mxu0 %v911
    %946 = vmatpush.bf16.msra.mxu0 %v910
    %947 = vmatpush.bf16.msra.mxu0 %v909
    %948 = vmatpush.bf16.msra.mxu0 %v908
    %949 = vmatpush.bf16.msra.mxu0 %v907
    %950 = vmatpush.bf16.msra.mxu0 %v906
    %951 = vmatmul.bf16.gmra.mxu0 %v797
    %v952 = vpop.f32.mrf.mxu0
    %v953 = vadd.f32 %v940, %v952
    %v954 = vpop.f32.mrf.mxu0
    %955 = vdwg.mxu0
    %v956 = vmax.f32 %v953, 0.0
    %v957 = vld [vmem:[%s5] sm:$0x1]
    %v959 = vperm.slane %v957, 0
    %v961 = vmul.f32 %v956, %v959
    %vm962 = vcmask 523264
    %v963 = vsel %vm962, %v961, 0.0
    %964 = vadd.xlane.f32.xlu0 %v963
    %v965 = vpop.xlane.xlu0 %964
    %s966 = sld [smem:[#allocation2]]
    %v967 = vstv %s966
    %v968 = vadd.f32 %v965, %v967
    %v970 = vlaneseq
    %v971 = vand.u32 %v970, 127
    %v972 = vperm.slane %v968, %v971
    %vm974 = vcmask 57344
    %975 = vst.msk [vmem:[#allocation6] sm:$0x1] %vm974, %v972
    // Predicated region
    $region34: #{tpu_custom_call.1} parent=1 // pred_check
      _
    $region35: #{tpu_custom_call.1} parent=1 // pred_check_branch
      %977 = sbr.rel (0) target = $region37
    $region36: #{tpu_custom_call.1} parent=1 // pred_region
      %979 = vsyncadd [#allocation5], 0
      %s981 = sshll.u32 [#allocation6], 4
      %s982 = int_to_ptr.vmem [resolvable:$true] %s981
      %s983 = sshll.u32 %s7, 4
      %s984 = int_to_ptr.hbm [resolvable:$true] %s983
      %986 = dma.vmem_to_hbm [thread:$0]  %s982, 16, %s984, [#allocation5]
    $region37: #{tpu_custom_call.1} parent=1 // pred_fallthru
      _
    // Predicated region
    $region38: #{tpu_custom_call.1} parent=1 // pred_check
      _
    $region39: #{tpu_custom_call.1} parent=1 // pred_check_branch
      %988 = sbr.rel (0) target = $region41
    $region40: #{tpu_custom_call.1} parent=1 // pred_region
      %990 = dma.done [#allocation5], 16
    $region41: #{tpu_custom_call.1} parent=1 // pred_fallthru
      _
    %991 = vsyncpa [#allocation4], 1
    %992 = vsyncpa [#allocation5], 1

</llo_original>
